<compile_context>
chip_gen: v5e
topology: v5e:2x2
jax: 0.10.0
libtpu: 0.0.40
codegen_flags: <defaults>
</compile_context>

<pallas_src>
import functools

import jax
import jax.numpy as jnp
from jax.experimental import pallas as pl
from jax.experimental.pallas import tpu as pltpu


# --------------------------------------------------------------------------- #
# Kernel
# --------------------------------------------------------------------------- #
def _res_block_core(x_ref, w1_ref, w2_ref, a1_ref, b1_ref, a2_ref, b2_ref,
                    wskip_ref, bskip_ref, o_ref, L, mxu_dtype):
    # x_ref   : (B_TILE, L, Cin)  f32
    # w1_ref  : (3, Cin, Cout)    w2_ref: (3, Cout, Cout)   (mxu dtype)
    # a*/b*   : (1, Cout) f32     fused BN affine (+ conv bias folded in)
    # wskip   : (Cin, Cout) or None (identity skip)
    # o_ref   : (B_TILE, L, Cout) f32
    bt = x_ref.shape[0]
    cin = x_ref.shape[2]
    cout = o_ref.shape[2]
    BL = bt * L

    # Flatten batch into the matmul M dimension.
    x2 = x_ref[...].reshape(BL, cin)          # f32
    xm = x2.astype(mxu_dtype)                 # MXU operand

    # Per-example boundary masks in the flattened (bt*L) row space: row l==0
    # has no left neighbour, row l==L-1 has no right neighbour (padding=1).
    pos = jax.lax.broadcasted_iota(jnp.int32, (BL, 1), 0) % L
    not_first = pos != 0
    not_last = pos != (L - 1)

    def conv3(inp_m, w_ref):
        # out[r] = inp[r-1] @ w[0] + inp[r] @ w[1] + inp[r+1] @ w[2]  (zero halo)
        y0 = jnp.dot(inp_m, w_ref[0], preferred_element_type=jnp.float32)
        y1 = jnp.dot(inp_m, w_ref[1], preferred_element_type=jnp.float32)
        y2 = jnp.dot(inp_m, w_ref[2], preferred_element_type=jnp.float32)
        # Shift tap-0 contributions down one row and tap-2 up one row via the
        # XLU sublane roll; wrapped / cross-example rows are masked off.
        y0s = pltpu.roll(y0, 1, 0)            # y0s[r] = y0[r-1]
        y2s = pltpu.roll(y2, BL - 1, 0)       # y2s[r] = y2[r+1]
        return (y1
                + jnp.where(not_first, y0s, 0.0)
                + jnp.where(not_last, y2s, 0.0))

    # conv1 -> fused (bias + BN1) affine -> ReLU         (all f32 elementwise)
    h = jnp.maximum(conv3(xm, w1_ref) * a1_ref[...] + b1_ref[...], 0.0)

    # conv2 -> fused (bias + BN2) affine
    out = conv3(h.astype(mxu_dtype), w2_ref) * a2_ref[...] + b2_ref[...]
    # TODO(synk): nn.Dropout is the identity in eval mode; training-mode random
    #             dropout masking is not implemented here.

    # Skip path: identity (no matmul, no weight DMA) or 1x1 conv.
    if wskip_ref is None:
        skip = x2                                              # Cin == Cout
    else:
        skip = (jnp.dot(xm, wskip_ref[...], preferred_element_type=jnp.float32)
                + bskip_ref[...])

    o_ref[...] = jnp.maximum(out + skip, 0.0).reshape(bt, L, cout)


def _res_kernel_proj(x_ref, w1_ref, w2_ref, a1_ref, b1_ref, a2_ref, b2_ref,
                     wskip_ref, bskip_ref, o_ref, *, L, mxu_dtype):
    _res_block_core(x_ref, w1_ref, w2_ref, a1_ref, b1_ref, a2_ref, b2_ref,
                    wskip_ref, bskip_ref, o_ref, L, mxu_dtype)


def _res_kernel_identity(x_ref, w1_ref, w2_ref, a1_ref, b1_ref, a2_ref, b2_ref,
                         o_ref, *, L, mxu_dtype):
    _res_block_core(x_ref, w1_ref, w2_ref, a1_ref, b1_ref, a2_ref, b2_ref,
                    None, None, o_ref, L, mxu_dtype)


# --------------------------------------------------------------------------- #
# Wrapper
# --------------------------------------------------------------------------- #
def _choose_batch_tile(N, L, Cin, Cout, vmem_budget_bytes):
    """How many batch elements to fuse per grid step.

    Bigger tiles amortize per-step overhead and enlarge the MXU M dimension,
    but double-buffered in/out blocks plus live f32/bf16 temporaries must stay
    well inside VMEM (64 MiB on v7x, 128 MiB on v5e/v6e).
    """
    # rough bytes per (example, position) row resident at peak:
    #   2x-buffered f32 x block + 2x-buffered f32 out block
    #   + ~10 live Cout-wide f32 temporaries + bf16 copies of x / h
    per_row = 8 * Cin + 8 * Cout + 2 * Cin + 40 * Cout + 2 * Cout
    rows_budget = max(L, vmem_budget_bytes // max(per_row, 1))
    rows_budget = min(rows_budget, 32 * 1024)   # keep single-step latency sane
    return max(1, min(N, rows_budget // L))


def residual_block(x_ncl, params, *, eps=1e-5, mxu_dtype=jnp.bfloat16,
                   vmem_budget_bytes=24 * 1024 * 1024):
    """x_ncl: (N, Cin, L) float32, same layout as the PyTorch module's input."""
    N, Cin, L = x_ncl.shape
    Cout = params["w1"].shape[2]
    has_projection = "wskip" in params
    if not has_projection:
        assert Cin == Cout, "identity skip requires Cin == Cout"

    # Fold BatchNorm (eval mode) + conv bias into per-channel affine a*y + b.
    a1 = params["bn1_gamma"] / jnp.sqrt(params["bn1_var"] + eps)
    b1 = params["bn1_beta"] - params["bn1_mean"] * a1 + a1 * params["b1"]
    a2 = params["bn2_gamma"] / jnp.sqrt(params["bn2_var"] + eps)
    b2 = params["bn2_beta"] - params["bn2_mean"] * a2 + a2 * params["b2"]
    a1 = a1.reshape(1, Cout).astype(jnp.float32)
    b1 = b1.reshape(1, Cout).astype(jnp.float32)
    a2 = a2.reshape(1, Cout).astype(jnp.float32)
    b2 = b2.reshape(1, Cout).astype(jnp.float32)

    # Channels-last; NO length padding (the k=3 halo is handled in-kernel).
    # TODO(synk): keep the surrounding model channels-last end-to-end to avoid
    #             these transposes entirely.
    x = jnp.transpose(x_ncl, (0, 2, 1)).astype(jnp.float32)      # (N, L, Cin)

    B_TILE = _choose_batch_tile(N, L, Cin, Cout, vmem_budget_bytes)
    N_pad = ((N + B_TILE - 1) // B_TILE) * B_TILE
    if N_pad != N:
        x = jnp.pad(x, ((0, N_pad - N), (0, 0), (0, 0)))

    w1 = params["w1"].astype(mxu_dtype)
    w2 = params["w2"].astype(mxu_dtype)

    inputs = [x, w1, w2, a1, b1, a2, b2]
    in_specs = [
        pl.BlockSpec((B_TILE, L, Cin), lambda n: (n, 0, 0)),     # x tile
        pl.BlockSpec((3, Cin, Cout), lambda n: (0, 0, 0)),       # w1 (resident)
        pl.BlockSpec((3, Cout, Cout), lambda n: (0, 0, 0)),      # w2 (resident)
        pl.BlockSpec((1, Cout), lambda n: (0, 0)),               # a1
        pl.BlockSpec((1, Cout), lambda n: (0, 0)),               # b1
        pl.BlockSpec((1, Cout), lambda n: (0, 0)),               # a2
        pl.BlockSpec((1, Cout), lambda n: (0, 0)),               # b2
    ]
    if has_projection:
        bskip = params["bskip"].reshape(1, Cout).astype(jnp.float32)
        inputs += [params["wskip"].astype(mxu_dtype), bskip]
        in_specs += [pl.BlockSpec((Cin, Cout), lambda n: (0, 0)),
                     pl.BlockSpec((1, Cout), lambda n: (0, 0))]
        kernel = functools.partial(_res_kernel_proj, L=L, mxu_dtype=mxu_dtype)
    else:
        kernel = functools.partial(_res_kernel_identity, L=L, mxu_dtype=mxu_dtype)

    out = pl.pallas_call(
        kernel,
        out_shape=jax.ShapeDtypeStruct((N_pad, L, Cout), jnp.float32),
        grid_spec=pltpu.PrefetchScalarGridSpec(
            num_scalar_prefetch=0,
            grid=(N_pad // B_TILE,),
            in_specs=in_specs,
            out_specs=pl.BlockSpec((B_TILE, L, Cout), lambda n: (n, 0, 0)),
        ),
        compiler_params=pltpu.CompilerParams(
            dimension_semantics=("parallel",),
            vmem_limit_bytes=48 * 1024 * 1024),
    )(*inputs)

    out = out[:N]
    return jnp.transpose(out, (0, 2, 1))                         # (N, Cout, L)


# --------------------------------------------------------------------------- #
# Params + pure-JAX reference
# --------------------------------------------------------------------------- #
def init_params(key, in_channels, out_channels):
    ks = jax.random.split(key, 14)
    f32 = jnp.float32
    params = {
        "w1": 0.1 * jax.random.normal(ks[0], (3, in_channels, out_channels), f32),
        "b1": 0.1 * jax.random.normal(ks[1], (out_channels,), f32),
        "w2": 0.1 * jax.random.normal(ks[2], (3, out_channels, out_channels), f32),
        "b2": 0.1 * jax.random.normal(ks[3], (out_channels,), f32),
        "bn1_gamma": 1.0 + 0.1 * jax.random.normal(ks[4], (out_channels,), f32),
        "bn1_beta": 0.1 * jax.random.normal(ks[5], (out_channels,), f32),
        "bn1_mean": 0.1 * jax.random.normal(ks[6], (out_channels,), f32),
        "bn1_var": jnp.abs(1.0 + 0.1 * jax.random.normal(ks[7], (out_channels,), f32)),
        "bn2_gamma": 1.0 + 0.1 * jax.random.normal(ks[8], (out_channels,), f32),
        "bn2_beta": 0.1 * jax.random.normal(ks[9], (out_channels,), f32),
        "bn2_mean": 0.1 * jax.random.normal(ks[10], (out_channels,), f32),
        "bn2_var": jnp.abs(1.0 + 0.1 * jax.random.normal(ks[11], (out_channels,), f32)),
    }
    if in_channels != out_channels:        # nn.Conv1d(in, out, kernel_size=1)
        params["wskip"] = 0.1 * jax.random.normal(
            ks[12], (in_channels, out_channels), f32)
        params["bskip"] = 0.1 * jax.random.normal(ks[13], (out_channels,), f32)
    return params                          # else: nn.Identity() -> no weights


def residual_block_reference(x_ncl, params, eps=1e-5):
    """Pure-JAX reference (no Pallas) for numerical verification."""
    x = jnp.transpose(x_ncl, (0, 2, 1))    # (N, L, Cin)
    L = x.shape[1]

    def conv3(x_nlc, w, b):
        xp = jnp.pad(x_nlc, ((0, 0), (1, 1), (0, 0)))
        acc = sum(jnp.einsum("nlc,cd->nld", xp[:, k:k + L, :], w[k])
                  for k in range(3))
        return acc + b

    def bn(y, g, beta, m, v):
        return g / jnp.sqrt(v + eps) * (y - m) + beta

    h = jax.nn.relu(bn(conv3(x, params["w1"], params["b1"]),
                       params["bn1_gamma"], params["bn1_beta"],
                       params["bn1_mean"], params["bn1_var"]))
    o = bn(conv3(h, params["w2"], params["b2"]),
           params["bn2_gamma"], params["bn2_beta"],
           params["bn2_mean"], params["bn2_var"])
    if "wskip" in params:
        skip = jnp.einsum("nlc,cd->nld", x, params["wskip"]) + params["bskip"]
    else:
        skip = x
    out = jax.nn.relu(o + skip)
    return jnp.transpose(out, (0, 2, 1))


# --------------------------------------------------------------------------- #
# Self-test
# --------------------------------------------------------------------------- #
if __name__ == "__main__":
    key = jax.random.PRNGKey(0)
    N, L = 2, 16
    configs = [
        # (Cin, Cout, MXU dtype, tolerance)
        (4, 8, jnp.float32, 1e-4),    # projection skip, tight f32 check
        (4, 8, jnp.bfloat16, 5e-2),   # projection skip, bf16 MXU operands
        (8, 8, jnp.bfloat16, 5e-2),   # identity skip path
    ]
    for i, (cin, cout, mxu_dtype, tol) in enumerate(configs):
        kx, kp = jax.random.split(jax.random.fold_in(key, i))
        x = jax.random.normal(kx, (N, cin, L), jnp.float32)
        params = init_params(kp, cin, cout)

        out = jax.block_until_ready(residual_block(x, params, mxu_dtype=mxu_dtype))
        ref = residual_block_reference(x, params)

        assert out.shape == (N, cout, L)
        assert jnp.allclose(out, ref, atol=tol, rtol=tol), (
            f"mismatch vs JAX reference (config {i}): "
            f"max abs err = {jnp.max(jnp.abs(out - ref))}")

    print("KERNEL_OK")
</pallas_src>

<mosaic_0001>
module attributes {stable_mosaic.version = 11 : i64} {
  func.func @_res_kernel_proj(%arg0: i32, %arg1: memref<2x16x4xf32, #tpu.memory_space<vmem>>, %arg2: memref<3x4x8xf32, #tpu.memory_space<vmem>>, %arg3: memref<3x8x8xf32, #tpu.memory_space<vmem>>, %arg4: memref<1x8xf32, #tpu.memory_space<vmem>>, %arg5: memref<1x8xf32, #tpu.memory_space<vmem>>, %arg6: memref<1x8xf32, #tpu.memory_space<vmem>>, %arg7: memref<1x8xf32, #tpu.memory_space<vmem>>, %arg8: memref<4x8xf32, #tpu.memory_space<vmem>>, %arg9: memref<1x8xf32, #tpu.memory_space<vmem>>, %arg10: memref<2x16x8xf32, #tpu.memory_space<vmem>>) attributes {dimension_semantics = [#tpu.dimension_semantics<parallel>], iteration_bounds = array<i64: 1>, scalar_prefetch = 0 : i64, scratch_operands = 0 : i64, tpu.core_type = #tpu.core_type<tc>, window_params = [{transform_indices = @transform_0, window_bounds = array<i64: 2, 16, 4>}, {pipeline_mode = #tpu.pipeline_mode<synchronous>, transform_indices = @transform_1, window_bounds = array<i64: 3, 4, 8>}, {pipeline_mode = #tpu.pipeline_mode<synchronous>, transform_indices = @transform_2, window_bounds = array<i64: 3, 8, 8>}, {pipeline_mode = #tpu.pipeline_mode<synchronous>, transform_indices = @transform_3, window_bounds = array<i64: 1, 8>}, {pipeline_mode = #tpu.pipeline_mode<synchronous>, transform_indices = @transform_4, window_bounds = array<i64: 1, 8>}, {pipeline_mode = #tpu.pipeline_mode<synchronous>, transform_indices = @transform_5, window_bounds = array<i64: 1, 8>}, {pipeline_mode = #tpu.pipeline_mode<synchronous>, transform_indices = @transform_6, window_bounds = array<i64: 1, 8>}, {pipeline_mode = #tpu.pipeline_mode<synchronous>, transform_indices = @transform_7, window_bounds = array<i64: 4, 8>}, {pipeline_mode = #tpu.pipeline_mode<synchronous>, transform_indices = @transform_8, window_bounds = array<i64: 1, 8>}, {transform_indices = @transform_9, window_bounds = array<i64: 2, 16, 8>}]} {
    %c0 = arith.constant 0 : index
    %c0_0 = arith.constant 0 : index
    %c0_1 = arith.constant 0 : index
    %0 = vector.load %arg1[%c0, %c0_0, %c0_1] : memref<2x16x4xf32, #tpu.memory_space<vmem>>, vector<2x16x4xf32>
    %1 = vector.shape_cast %0 : vector<2x16x4xf32> to vector<32x4xf32>
    %2 = tpu.iota {dimensions = array<i32: 0>} : vector<32x1xi32>
    %c16_i32 = arith.constant 16 : i32
    %c0_i32 = arith.constant 0 : i32
    %3 = arith.cmpi eq, %c16_i32, %c0_i32 : i32
    %c1_i32 = arith.constant 1 : i32
    %4 = arith.select %3, %c1_i32, %c16_i32 : i32
    %5 = vector.broadcast %4 : i32 to vector<32x1xi32>
    %6 = arith.remsi %2, %5 : vector<32x1xi32>
    %c0_i32_2 = arith.constant 0 : i32
    %7 = vector.broadcast %c0_i32_2 : i32 to vector<32x1xi32>
    %8 = arith.cmpi ne, %6, %7 : vector<32x1xi32>
    %c0_i32_3 = arith.constant 0 : i32
    %9 = vector.broadcast %c0_i32_3 : i32 to vector<32x1xi32>
    %10 = arith.cmpi slt, %6, %9 : vector<32x1xi32>
    %c0_i32_4 = arith.constant 0 : i32
    %11 = arith.cmpi slt, %4, %c0_i32_4 : i32
    %12 = vector.broadcast %11 : i1 to vector<32x1xi1>
    %13 = vector.broadcast %12 : vector<32x1xi1> to vector<32x1xi1>
    %14 = arith.xori %10, %13 : vector<32x1xi1>
    %15 = arith.andi %14, %8 : vector<32x1xi1>
    %16 = vector.broadcast %4 : i32 to vector<32x1xi32>
    %17 = arith.addi %6, %16 : vector<32x1xi32>
    %18 = arith.select %15, %17, %6 : vector<32x1xi1>, vector<32x1xi32>
    %c0_i32_5 = arith.constant 0 : i32
    %19 = vector.broadcast %c0_i32_5 : i32 to vector<32x1xi32>
    %20 = arith.cmpi ne, %18, %19 : vector<32x1xi32>
    %c15_i32 = arith.constant 15 : i32
    %21 = vector.broadcast %c15_i32 : i32 to vector<32x1xi32>
    %22 = arith.cmpi ne, %18, %21 : vector<32x1xi32>
    %c0_6 = arith.constant 0 : index
    %c0_7 = arith.constant 0 : index
    %c0_8 = arith.constant 0 : index
    %23 = vector.load %arg2[%c0_6, %c0_7, %c0_8] : memref<3x4x8xf32, #tpu.memory_space<vmem>>, vector<1x4x8xf32>
    %24 = vector.shape_cast %23 : vector<1x4x8xf32> to vector<4x8xf32>
    %cst = arith.constant dense<0.000000e+00> : vector<32x8xf32>
    %25 = tpu.matmul %1, %24, %cst {dimension_numbers = #tpu.dot_dimension_numbers<[1], [0], [0], [1], [0, 0, 1, 1], [], []>} : vector<32x4xf32>, vector<4x8xf32>, vector<32x8xf32> -> vector<32x8xf32>
    %c1 = arith.constant 1 : index
    %c0_9 = arith.constant 0 : index
    %c0_10 = arith.constant 0 : index
    %26 = vector.load %arg2[%c1, %c0_9, %c0_10] : memref<3x4x8xf32, #tpu.memory_space<vmem>>, vector<1x4x8xf32>
    %27 = vector.shape_cast %26 : vector<1x4x8xf32> to vector<4x8xf32>
    %cst_11 = arith.constant dense<0.000000e+00> : vector<32x8xf32>
    %28 = tpu.matmul %1, %27, %cst_11 {dimension_numbers = #tpu.dot_dimension_numbers<[1], [0], [0], [1], [0, 0, 1, 1], [], []>} : vector<32x4xf32>, vector<4x8xf32>, vector<32x8xf32> -> vector<32x8xf32>
    %c2 = arith.constant 2 : index
    %c0_12 = arith.constant 0 : index
    %c0_13 = arith.constant 0 : index
    %29 = vector.load %arg2[%c2, %c0_12, %c0_13] : memref<3x4x8xf32, #tpu.memory_space<vmem>>, vector<1x4x8xf32>
    %30 = vector.shape_cast %29 : vector<1x4x8xf32> to vector<4x8xf32>
    %cst_14 = arith.constant dense<0.000000e+00> : vector<32x8xf32>
    %31 = tpu.matmul %1, %30, %cst_14 {dimension_numbers = #tpu.dot_dimension_numbers<[1], [0], [0], [1], [0, 0, 1, 1], [], []>} : vector<32x4xf32>, vector<4x8xf32>, vector<32x8xf32> -> vector<32x8xf32>
    %c1_i32_15 = arith.constant 1 : i32
    %32 = tpu.dynamic_rotate %25 by %c1_i32_15 dim 0 : vector<32x8xf32>, i32 -> vector<32x8xf32>
    %c31_i32 = arith.constant 31 : i32
    %33 = tpu.dynamic_rotate %31 by %c31_i32 dim 0 : vector<32x8xf32>, i32 -> vector<32x8xf32>
    %cst_16 = arith.constant 0.000000e+00 : f32
    %34 = vector.shape_cast %20 : vector<32x1xi1> to vector<32x1xi1>
    %35 = vector.broadcast %34 : vector<32x1xi1> to vector<32x8xi1>
    %36 = vector.broadcast %cst_16 : f32 to vector<32x8xf32>
    %37 = arith.select %35, %32, %36 : vector<32x8xi1>, vector<32x8xf32>
    %38 = arith.addf %28, %37 : vector<32x8xf32>
    %cst_17 = arith.constant 0.000000e+00 : f32
    %39 = vector.shape_cast %22 : vector<32x1xi1> to vector<32x1xi1>
    %40 = vector.broadcast %39 : vector<32x1xi1> to vector<32x8xi1>
    %41 = vector.broadcast %cst_17 : f32 to vector<32x8xf32>
    %42 = arith.select %40, %33, %41 : vector<32x8xi1>, vector<32x8xf32>
    %43 = arith.addf %38, %42 : vector<32x8xf32>
    %c0_18 = arith.constant 0 : index
    %c0_19 = arith.constant 0 : index
    %44 = vector.load %arg4[%c0_18, %c0_19] : memref<1x8xf32, #tpu.memory_space<vmem>>, vector<1x8xf32>
    %45 = vector.broadcast %44 : vector<1x8xf32> to vector<32x8xf32>
    %46 = arith.mulf %43, %45 : vector<32x8xf32>
    %c0_20 = arith.constant 0 : index
    %c0_21 = arith.constant 0 : index
    %47 = vector.load %arg5[%c0_20, %c0_21] : memref<1x8xf32, #tpu.memory_space<vmem>>, vector<1x8xf32>
    %48 = vector.broadcast %47 : vector<1x8xf32> to vector<32x8xf32>
    %49 = arith.addf %46, %48 : vector<32x8xf32>
    %cst_22 = arith.constant 0.000000e+00 : f32
    %50 = vector.broadcast %cst_22 : f32 to vector<32x8xf32>
    %51 = arith.maximumf %49, %50 : vector<32x8xf32>
    %c0_23 = arith.constant 0 : index
    %c0_24 = arith.constant 0 : index
    %c0_25 = arith.constant 0 : index
    %52 = vector.load %arg3[%c0_23, %c0_24, %c0_25] : memref<3x8x8xf32, #tpu.memory_space<vmem>>, vector<1x8x8xf32>
    %53 = vector.shape_cast %52 : vector<1x8x8xf32> to vector<8x8xf32>
    %cst_26 = arith.constant dense<0.000000e+00> : vector<32x8xf32>
    %54 = tpu.matmul %51, %53, %cst_26 {dimension_numbers = #tpu.dot_dimension_numbers<[1], [0], [0], [1], [0, 0, 1, 1], [], []>} : vector<32x8xf32>, vector<8x8xf32>, vector<32x8xf32> -> vector<32x8xf32>
    %c1_27 = arith.constant 1 : index
    %c0_28 = arith.constant 0 : index
    %c0_29 = arith.constant 0 : index
    %55 = vector.load %arg3[%c1_27, %c0_28, %c0_29] : memref<3x8x8xf32, #tpu.memory_space<vmem>>, vector<1x8x8xf32>
    %56 = vector.shape_cast %55 : vector<1x8x8xf32> to vector<8x8xf32>
    %cst_30 = arith.constant dense<0.000000e+00> : vector<32x8xf32>
    %57 = tpu.matmul %51, %56, %cst_30 {dimension_numbers = #tpu.dot_dimension_numbers<[1], [0], [0], [1], [0, 0, 1, 1], [], []>} : vector<32x8xf32>, vector<8x8xf32>, vector<32x8xf32> -> vector<32x8xf32>
    %c2_31 = arith.constant 2 : index
    %c0_32 = arith.constant 0 : index
    %c0_33 = arith.constant 0 : index
    %58 = vector.load %arg3[%c2_31, %c0_32, %c0_33] : memref<3x8x8xf32, #tpu.memory_space<vmem>>, vector<1x8x8xf32>
    %59 = vector.shape_cast %58 : vector<1x8x8xf32> to vector<8x8xf32>
    %cst_34 = arith.constant dense<0.000000e+00> : vector<32x8xf32>
    %60 = tpu.matmul %51, %59, %cst_34 {dimension_numbers = #tpu.dot_dimension_numbers<[1], [0], [0], [1], [0, 0, 1, 1], [], []>} : vector<32x8xf32>, vector<8x8xf32>, vector<32x8xf32> -> vector<32x8xf32>
    %c1_i32_35 = arith.constant 1 : i32
    %61 = tpu.dynamic_rotate %54 by %c1_i32_35 dim 0 : vector<32x8xf32>, i32 -> vector<32x8xf32>
    %c31_i32_36 = arith.constant 31 : i32
    %62 = tpu.dynamic_rotate %60 by %c31_i32_36 dim 0 : vector<32x8xf32>, i32 -> vector<32x8xf32>
    %cst_37 = arith.constant 0.000000e+00 : f32
    %63 = vector.shape_cast %20 : vector<32x1xi1> to vector<32x1xi1>
    %64 = vector.broadcast %63 : vector<32x1xi1> to vector<32x8xi1>
    %65 = vector.broadcast %cst_37 : f32 to vector<32x8xf32>
    %66 = arith.select %64, %61, %65 : vector<32x8xi1>, vector<32x8xf32>
    %67 = arith.addf %57, %66 : vector<32x8xf32>
    %cst_38 = arith.constant 0.000000e+00 : f32
    %68 = vector.shape_cast %22 : vector<32x1xi1> to vector<32x1xi1>
    %69 = vector.broadcast %68 : vector<32x1xi1> to vector<32x8xi1>
    %70 = vector.broadcast %cst_38 : f32 to vector<32x8xf32>
    %71 = arith.select %69, %62, %70 : vector<32x8xi1>, vector<32x8xf32>
    %72 = arith.addf %67, %71 : vector<32x8xf32>
    %c0_39 = arith.constant 0 : index
    %c0_40 = arith.constant 0 : index
    %73 = vector.load %arg6[%c0_39, %c0_40] : memref<1x8xf32, #tpu.memory_space<vmem>>, vector<1x8xf32>
    %74 = vector.broadcast %73 : vector<1x8xf32> to vector<32x8xf32>
    %75 = arith.mulf %72, %74 : vector<32x8xf32>
    %c0_41 = arith.constant 0 : index
    %c0_42 = arith.constant 0 : index
    %76 = vector.load %arg7[%c0_41, %c0_42] : memref<1x8xf32, #tpu.memory_space<vmem>>, vector<1x8xf32>
    %77 = vector.broadcast %76 : vector<1x8xf32> to vector<32x8xf32>
    %78 = arith.addf %75, %77 : vector<32x8xf32>
    %c0_43 = arith.constant 0 : index
    %c0_44 = arith.constant 0 : index
    %79 = vector.load %arg8[%c0_43, %c0_44] : memref<4x8xf32, #tpu.memory_space<vmem>>, vector<4x8xf32>
    %cst_45 = arith.constant dense<0.000000e+00> : vector<32x8xf32>
    %80 = tpu.matmul %1, %79, %cst_45 {dimension_numbers = #tpu.dot_dimension_numbers<[1], [0], [0], [1], [0, 0, 1, 1], [], []>} : vector<32x4xf32>, vector<4x8xf32>, vector<32x8xf32> -> vector<32x8xf32>
    %c0_46 = arith.constant 0 : index
    %c0_47 = arith.constant 0 : index
    %81 = vector.load %arg9[%c0_46, %c0_47] : memref<1x8xf32, #tpu.memory_space<vmem>>, vector<1x8xf32>
    %82 = vector.broadcast %81 : vector<1x8xf32> to vector<32x8xf32>
    %83 = arith.addf %80, %82 : vector<32x8xf32>
    %84 = arith.addf %78, %83 : vector<32x8xf32>
    %cst_48 = arith.constant 0.000000e+00 : f32
    %85 = vector.broadcast %cst_48 : f32 to vector<32x8xf32>
    %86 = arith.maximumf %84, %85 : vector<32x8xf32>
    %87 = vector.shape_cast %86 : vector<32x8xf32> to vector<2x16x8xf32>
    %c0_49 = arith.constant 0 : index
    %c0_50 = arith.constant 0 : index
    %c0_51 = arith.constant 0 : index
    %88 = vector.load %arg10[%c0_49, %c0_50, %c0_51] : memref<2x16x8xf32, #tpu.memory_space<vmem>>, vector<2x16x8xf32>
    tpu.vector_store %arg10[%c0_49, %c0_50, %c0_51], %87 {strides = array<i32>} : memref<2x16x8xf32, #tpu.memory_space<vmem>>, vector<2x16x8xf32>,
    return
  }
  func.func @transform_0(%arg0: i32) -> (i32, i32, i32) {
    %c0_i32 = arith.constant 0 : i32
    %c0_i32_0 = arith.constant 0 : i32
    %c0_i32_1 = arith.constant 0 : i32
    return %arg0, %c0_i32, %c0_i32_0 : i32, i32, i32
  }
  func.func @transform_1(%arg0: i32) -> (i32, i32, i32) {
    %c0_i32 = arith.constant 0 : i32
    %c0_i32_0 = arith.constant 0 : i32
    %c0_i32_1 = arith.constant 0 : i32
    %c0_i32_2 = arith.constant 0 : i32
    return %c0_i32, %c0_i32_0, %c0_i32_1 : i32, i32, i32
  }
  func.func @transform_2(%arg0: i32) -> (i32, i32, i32) {
    %c0_i32 = arith.constant 0 : i32
    %c0_i32_0 = arith.constant 0 : i32
    %c0_i32_1 = arith.constant 0 : i32
    %c0_i32_2 = arith.constant 0 : i32
    return %c0_i32, %c0_i32_0, %c0_i32_1 : i32, i32, i32
  }
  func.func @transform_3(%arg0: i32) -> (i32, i32) {
    %c0_i32 = arith.constant 0 : i32
    %c0_i32_0 = arith.constant 0 : i32
    %c0_i32_1 = arith.constant 0 : i32
    return %c0_i32, %c0_i32_0 : i32, i32
  }
  func.func @transform_4(%arg0: i32) -> (i32, i32) {
    %c0_i32 = arith.constant 0 : i32
    %c0_i32_0 = arith.constant 0 : i32
    %c0_i32_1 = arith.constant 0 : i32
    return %c0_i32, %c0_i32_0 : i32, i32
  }
  func.func @transform_5(%arg0: i32) -> (i32, i32) {
    %c0_i32 = arith.constant 0 : i32
    %c0_i32_0 = arith.constant 0 : i32
    %c0_i32_1 = arith.constant 0 : i32
    return %c0_i32, %c0_i32_0 : i32, i32
  }
  func.func @transform_6(%arg0: i32) -> (i32, i32) {
    %c0_i32 = arith.constant 0 : i32
    %c0_i32_0 = arith.constant 0 : i32
    %c0_i32_1 = arith.constant 0 : i32
    return %c0_i32, %c0_i32_0 : i32, i32
  }
  func.func @transform_7(%arg0: i32) -> (i32, i32) {
    %c0_i32 = arith.constant 0 : i32
    %c0_i32_0 = arith.constant 0 : i32
    %c0_i32_1 = arith.constant 0 : i32
    return %c0_i32, %c0_i32_0 : i32, i32
  }
  func.func @transform_8(%arg0: i32) -> (i32, i32) {
    %c0_i32 = arith.constant 0 : i32
    %c0_i32_0 = arith.constant 0 : i32
    %c0_i32_1 = arith.constant 0 : i32
    return %c0_i32, %c0_i32_0 : i32, i32
  }
  func.func @transform_9(%arg0: i32) -> (i32, i32, i32) {
    %c0_i32 = arith.constant 0 : i32
    %c0_i32_0 = arith.constant 0 : i32
    %c0_i32_1 = arith.constant 0 : i32
    return %arg0, %c0_i32, %c0_i32_0 : i32, i32, i32
  }
}

</mosaic_0001>

<llo_original>
// kernel: tpu_custom_call.1
$region0: #{tpu_custom_call.1}
  #allocation0 [shape = 'u32[]', space=smem, size = 0x4, offset = 0x4, fixed_abs, tag = 'smem constant byte address 0x4 - core index']
  #allocation1 [shape = 'u32[72,128]{1,0:T(1,128)}', space=vmem, size = 0x9000, scoped, tag = 'internal scratch']
  %s0 = inlined_call_operand.vmem [shape: f32[2,16,4], index: 0, kind: input, shape index: {}]
  %s1 = inlined_call_operand.vmem [shape: f32[3,4,8], index: 1, kind: input, shape index: {}]
  %s2 = inlined_call_operand.vmem [shape: f32[3,8,8], index: 2, kind: input, shape index: {}]
  %s3 = inlined_call_operand.vmem [shape: f32[1,8], index: 3, kind: input, shape index: {}]
  %s4 = inlined_call_operand.vmem [shape: f32[1,8], index: 4, kind: input, shape index: {}]
  %s5 = inlined_call_operand.vmem [shape: f32[1,8], index: 5, kind: input, shape index: {}]
  %s6 = inlined_call_operand.vmem [shape: f32[1,8], index: 6, kind: input, shape index: {}]
  %s7 = inlined_call_operand.vmem [shape: f32[4,8], index: 7, kind: input, shape index: {}]
  %s8 = inlined_call_operand.vmem [shape: f32[1,8], index: 8, kind: input, shape index: {}]
  %s9 = inlined_call_operand.vmem [shape: f32[2,16,8], index: 9, kind: output, shape index: {}]
  %s10 = sld [smem:[#allocation0]]
  $region46: #{tpu_custom_call.1} parent=0
    _
  %s12 = ssub.s32 1, %s10
  %s13 = scalar_select 0, %s12, %s10
  // Predicated region
  $region2: #{tpu_custom_call.1} parent=0 // pred_check
    _
  $region3: #{tpu_custom_call.1} parent=0 // pred_check_branch
    %15 = sbr.rel (0) target = $region5
  $region4: #{tpu_custom_call.1} parent=0 // pred_region
    _
  $region5: #{tpu_custom_call.1} parent=0 // pred_fallthru
    _
  // Predicated region
  $region6: #{tpu_custom_call.1} parent=0 // pred_check
    _
  $region7: #{tpu_custom_call.1} parent=0 // pred_check_branch
    %17 = sbr.rel (0) target = $region9
  $region8: #{tpu_custom_call.1} parent=0 // pred_region
    _
  $region9: #{tpu_custom_call.1} parent=0 // pred_fallthru
    _
  // Predicated region
  $region10: #{tpu_custom_call.1} parent=0 // pred_check
    _
  $region11: #{tpu_custom_call.1} parent=0 // pred_check_branch
    %19 = sbr.rel (0) target = $region13
  $region12: #{tpu_custom_call.1} parent=0 // pred_region
    _
  $region13: #{tpu_custom_call.1} parent=0 // pred_fallthru
    _
  // Predicated region
  $region14: #{tpu_custom_call.1} parent=0 // pred_check
    _
  $region15: #{tpu_custom_call.1} parent=0 // pred_check_branch
    %21 = sbr.rel (0) target = $region17
  $region16: #{tpu_custom_call.1} parent=0 // pred_region
    _
  $region17: #{tpu_custom_call.1} parent=0 // pred_fallthru
    _
  // Predicated region
  $region18: #{tpu_custom_call.1} parent=0 // pred_check
    _
  $region19: #{tpu_custom_call.1} parent=0 // pred_check_branch
    %23 = sbr.rel (0) target = $region21
  $region20: #{tpu_custom_call.1} parent=0 // pred_region
    _
  $region21: #{tpu_custom_call.1} parent=0 // pred_fallthru
    _
  // Predicated region
  $region22: #{tpu_custom_call.1} parent=0 // pred_check
    _
  $region23: #{tpu_custom_call.1} parent=0 // pred_check_branch
    %25 = sbr.rel (0) target = $region25
  $region24: #{tpu_custom_call.1} parent=0 // pred_region
    _
  $region25: #{tpu_custom_call.1} parent=0 // pred_fallthru
    _
  // Predicated region
  $region26: #{tpu_custom_call.1} parent=0 // pred_check
    _
  $region27: #{tpu_custom_call.1} parent=0 // pred_check_branch
    %27 = sbr.rel (0) target = $region29
  $region28: #{tpu_custom_call.1} parent=0 // pred_region
    _
  $region29: #{tpu_custom_call.1} parent=0 // pred_fallthru
    _
  // Predicated region
  $region30: #{tpu_custom_call.1} parent=0 // pred_check
    _
  $region31: #{tpu_custom_call.1} parent=0 // pred_check_branch
    %29 = sbr.rel (0) target = $region33
  $region32: #{tpu_custom_call.1} parent=0 // pred_region
    _
  $region33: #{tpu_custom_call.1} parent=0 // pred_fallthru
    _
  // Predicated region
  $region34: #{tpu_custom_call.1} parent=0 // pred_check
    _
  $region35: #{tpu_custom_call.1} parent=0 // pred_check_branch
    %31 = sbr.rel (0) target = $region37
  $region36: #{tpu_custom_call.1} parent=0 // pred_region
    _
  $region37: #{tpu_custom_call.1} parent=0 // pred_fallthru
    _
  %v32 = vld [vmem:[%s0] sm:$0xff]
  %v33 = vld [vmem:[%s0 + $0x8] sm:$0xff]
  %v34 = vld [vmem:[%s0 + $0x10] sm:$0xff]
  %v35 = vld [vmem:[%s0 + $0x18] sm:$0xff]
  %v36 = vlaneseq
  %v37 = vshrl.u32 %v36, 7
  %v38 = vadd.s32 %v37, 8
  %v39 = vadd.s32 %v37, 16
  %v40 = vadd.s32 %v37, 24
  %vm41 = vcmp.lt.s32.totalorder %v37, 0
  %v42 = vsub.s32 0, %v37
  %v43 = vsel %vm41, %v42, %v37
  %v44 = vshrl.u32 %v43, 4
  %v45 = vand.u32 %v43, 15
  %v46 = vsub.s32 0, %v45
  %v47 = vsel %vm41, %v46, %v45
  %vm48 = vcmp.lt.s32.totalorder %v38, 0
  %v49 = vsub.s32 0, %v38
  %v50 = vsel %vm48, %v49, %v38
  %v51 = vshrl.u32 %v50, 4
  %v52 = vand.u32 %v50, 15
  %v53 = vsub.s32 0, %v52
  %v54 = vsel %vm48, %v53, %v52
  %vm55 = vcmp.lt.s32.totalorder %v39, 0
  %v56 = vsub.s32 0, %v39
  %v57 = vsel %vm55, %v56, %v39
  %v58 = vshrl.u32 %v57, 4
  %v59 = vand.u32 %v57, 15
  %v60 = vsub.s32 0, %v59
  %v61 = vsel %vm55, %v60, %v59
  %vm62 = vcmp.lt.s32.totalorder %v40, 0
  %v63 = vsub.s32 0, %v40
  %v64 = vsel %vm62, %v63, %v40
  %v65 = vshrl.u32 %v64, 4
  %v66 = vand.u32 %v64, 15
  %v67 = vsub.s32 0, %v66
  %v68 = vsel %vm62, %v67, %v66
  %vm69 = vcmp.ne.s32.totalorder %v47, 0
  %vm70 = vcmp.ne.s32.totalorder %v54, 0
  %vm71 = vcmp.ne.s32.totalorder %v61, 0
  %vm72 = vcmp.ne.s32.totalorder %v68, 0
  %vm73 = vcmp.lt.s32.totalorder %v47, 0
  %vm74 = vcmp.lt.s32.totalorder %v54, 0
  %vm75 = vcmp.lt.s32.totalorder %v61, 0
  %vm76 = vcmp.lt.s32.totalorder %v68, 0
  %vm77 = vmand %vm73, %vm69
  %vm78 = vmand %vm74, %vm70
  %vm79 = vmand %vm75, %vm71
  %vm80 = vmand %vm76, %vm72
  %v81 = vadd.s32 %v47, 16
  %v82 = vadd.s32 %v54, 16
  %v83 = vadd.s32 %v61, 16
  %v84 = vadd.s32 %v68, 16
  %v85 = vsel %vm77, %v81, %v47
  %v86 = vsel %vm78, %v82, %v54
  %v87 = vsel %vm79, %v83, %v61
  %v88 = vsel %vm80, %v84, %v68
  %vm89 = vcmp.ne.s32.totalorder %v85, 0
  %vm90 = vcmp.ne.s32.totalorder %v86, 0
  %vm91 = vcmp.ne.s32.totalorder %v87, 0
  %vm92 = vcmp.ne.s32.totalorder %v88, 0
  %vm93 = vcmp.ne.s32.totalorder %v85, 15
  %vm94 = vcmp.ne.s32.totalorder %v86, 15
  %vm95 = vcmp.ne.s32.totalorder %v87, 15
  %vm96 = vcmp.ne.s32.totalorder %v88, 15
  %v97 = vld [vmem:[%s1] sm:$0xf]
  %vm98 = vcmask 31744
  %v100 = vsel %vm98, %v32, 0
  %v103 = vsel %vm98, %v33, 0
  %v106 = vsel %vm98, %v34, 0
  %v109 = vsel %vm98, %v35, 0
  %vm111 = vcmask 1043456
  %v113 = vsel %vm111, %v97, 0
  %115 = vmatpush.msra.mxu0 0.0
  %116 = vmatpush.msra.mxu0 0.0
  %117 = vmatpush.msra.mxu0 0.0
  %118 = vmatpush.msra.mxu0 0.0
  %119 = vmatpush.msra.mxu0 0.0
  %120 = vmatpush.msra.mxu0 0.0
  %121 = vmatpush.msra.mxu0 0.0
  %122 = vmatpush.msra.mxu0 0.0
  %123 = vmatpush.msra.mxu0 0.0
  %124 = vmatpush.msra.mxu0 0.0
  %125 = vmatpush.msra.mxu0 0.0
  %126 = vmatpush.msra.mxu0 0.0
  %127 = vmatpush.msra.mxu0 0.0
  %128 = vmatpush.msra.mxu0 0.0
  %129 = vmatpush.msra.mxu0 0.0
  %130 = vmatpush.msra.mxu0 %v113
  %131 = vmatmul.f32.gmra.mxu0 %v100
  %v132 = vpop.f32.mrf.mxu0
  %v133 = vadd.f32 0.0, %v132
  %134 = vmatmul.f32.gmra.mxu0 %v103
  %v135 = vpop.f32.mrf.mxu0
  %v136 = vadd.f32 0.0, %v135
  %137 = vmatmul.f32.gmra.mxu0 %v106
  %v138 = vpop.f32.mrf.mxu0
  %v139 = vadd.f32 0.0, %v138
  %140 = vmatmul.f32.gmra.mxu0 %v109
  %v141 = vpop.f32.mrf.mxu0
  %v142 = vadd.f32 0.0, %v141
  %143 = vdwg.mxu0
  %s144 = scalar_lea.vmem %s1, 4
  %v145 = vld [vmem:[%s144] sm:$0xf]
  %s146 = scalar_lea.vmem %s1, 8
  %v147 = vld [vmem:[%s146] sm:$0xf]
  %v149 = vsel %vm111, %v147, 0
  %151 = vmatpush.msra.mxu0 0.0
  %152 = vmatpush.msra.mxu0 0.0
  %153 = vmatpush.msra.mxu0 0.0
  %154 = vmatpush.msra.mxu0 0.0
  %155 = vmatpush.msra.mxu0 0.0
  %156 = vmatpush.msra.mxu0 0.0
  %157 = vmatpush.msra.mxu0 0.0
  %158 = vmatpush.msra.mxu0 0.0
  %159 = vmatpush.msra.mxu0 0.0
  %160 = vmatpush.msra.mxu0 0.0
  %161 = vmatpush.msra.mxu0 0.0
  %162 = vmatpush.msra.mxu0 0.0
  %163 = vmatpush.msra.mxu0 0.0
  %164 = vmatpush.msra.mxu0 0.0
  %165 = vmatpush.msra.mxu0 0.0
  %166 = vmatpush.msra.mxu0 %v149
  %167 = vmatmul.f32.gmra.mxu0 %v100
  %v168 = vpop.f32.mrf.mxu0
  %v169 = vadd.f32 0.0, %v168
  %170 = vmatmul.f32.gmra.mxu0 %v103
  %v171 = vpop.f32.mrf.mxu0
  %v172 = vadd.f32 0.0, %v171
  %173 = vmatmul.f32.gmra.mxu0 %v106
  %v174 = vpop.f32.mrf.mxu0
  %v175 = vadd.f32 0.0, %v174
  %176 = vmatmul.f32.gmra.mxu0 %v109
  %v177 = vpop.f32.mrf.mxu0
  %v178 = vadd.f32 0.0, %v177
  %179 = vdwg.mxu0
  %v180 = vrot.slane %v133, 7
  %v181 = vrot.slane %v136, 7
  %v182 = vrot.slane %v139, 7
  %v183 = vrot.slane %v142, 7
  %vm184 = vcmp.lt.s32.totalorder %v37, 1
  %v185 = vsel %vm184, %v182, %v183
  %v186 = vsel %vm184, %v181, %v182
  %v187 = vsel %vm184, %v180, %v181
  %v188 = vsel %vm184, %v183, %v180
  %v189 = vrot.slane %v169, 1
  %v190 = vrot.slane %v172, 1
  %v191 = vrot.slane %v175, 1
  %v192 = vrot.slane %v178, 1
  %vm193 = vcmp.lt.s32.totalorder %v37, 7
  %v194 = vsel %vm193, %v191, %v192
  %v195 = vsel %vm193, %v190, %v191
  %v196 = vsel %vm193, %v189, %v190
  %v197 = vsel %vm193, %v192, %v189
  %v198 = vsel %vm89, 1, 0
  %v199 = vsel %vm90, 1, 0
  %v200 = vsel %vm91, 1, 0
  %v201 = vsel %vm92, 1, 0
  %vm202 = vcmp.eq.s32.totalorder %v198, 1
  %vm203 = vcmp.eq.s32.totalorder %v199, 1
  %vm204 = vcmp.eq.s32.totalorder %v200, 1
  %vm205 = vcmp.eq.s32.totalorder %v201, 1
  %v206 = vsel %vm202, %v188, 0.0
  %v207 = vsel %vm203, %v187, 0.0
  %v208 = vsel %vm204, %v186, 0.0
  %v209 = vsel %vm205, %v185, 0.0
  %v211 = vsel %vm111, %v145, 0
  %213 = vmatpush.msra.mxu0 0.0
  %214 = vmatpush.msra.mxu0 0.0
  %215 = vmatpush.msra.mxu0 0.0
  %216 = vmatpush.msra.mxu0 0.0
  %217 = vmatpush.msra.mxu0 0.0
  %218 = vmatpush.msra.mxu0 0.0
  %219 = vmatpush.msra.mxu0 0.0
  %220 = vmatpush.msra.mxu0 0.0
  %221 = vmatpush.msra.mxu0 0.0
  %222 = vmatpush.msra.mxu0 0.0
  %223 = vmatpush.msra.mxu0 0.0
  %224 = vmatpush.msra.mxu0 0.0
  %225 = vmatpush.msra.mxu0 0.0
  %226 = vmatpush.msra.mxu0 0.0
  %227 = vmatpush.msra.mxu0 0.0
  %228 = vmatpush.msra.mxu0 %v211
  %229 = vmatmul.f32.gmra.mxu0 %v100
  %v230 = vpop.f32.mrf.mxu0
  %v231 = vadd.f32 %v206, %v230
  %232 = vmatmul.f32.gmra.mxu0 %v103
  %v233 = vpop.f32.mrf.mxu0
  %v234 = vadd.f32 %v207, %v233
  %235 = vmatmul.f32.gmra.mxu0 %v106
  %v236 = vpop.f32.mrf.mxu0
  %v237 = vadd.f32 %v208, %v236
  %238 = vmatmul.f32.gmra.mxu0 %v109
  %v239 = vpop.f32.mrf.mxu0
  %v240 = vadd.f32 %v209, %v239
  %241 = vdwg.mxu0
  %v242 = vsel %vm93, 1, 0
  %v243 = vsel %vm94, 1, 0
  %v244 = vsel %vm95, 1, 0
  %v245 = vsel %vm96, 1, 0
  %vm246 = vcmp.eq.s32.totalorder %v242, 1
  %vm247 = vcmp.eq.s32.totalorder %v243, 1
  %vm248 = vcmp.eq.s32.totalorder %v244, 1
  %vm249 = vcmp.eq.s32.totalorder %v245, 1
  %v250 = vsel %vm246, %v196, 0.0
  %v251 = vsel %vm247, %v195, 0.0
  %v252 = vsel %vm248, %v194, 0.0
  %v253 = vsel %vm249, %v197, 0.0
  %v254 = vadd.f32 %v231, %v250
  %v255 = vadd.f32 %v234, %v251
  %v256 = vadd.f32 %v237, %v252
  %v257 = vadd.f32 %v240, %v253
  %v258 = vld [vmem:[%s3] sm:$0x1]
  %v260 = vperm.slane %v258, 0
  %v262 = vmul.f32 %v254, %v260
  %v263 = vmul.f32 %v255, %v260
  %v264 = vmul.f32 %v256, %v260
  %v265 = vmul.f32 %v257, %v260
  %v266 = vld [vmem:[%s4] sm:$0x1]
  %v268 = vperm.slane %v266, 0
  %v270 = vadd.f32 %v262, %v268
  %v271 = vadd.f32 %v263, %v268
  %v272 = vadd.f32 %v264, %v268
  %v273 = vadd.f32 %v265, %v268
  %v274 = vmax.f32 %v270, 0.0
  %v275 = vmax.f32 %v271, 0.0
  %v276 = vmax.f32 %v272, 0.0
  %v277 = vmax.f32 %v273, 0.0
  %v278 = vld [vmem:[%s2] sm:$0xff]
  %vm279 = vcmask 64512
  %v281 = vsel %vm279, %v274, 0
  %v284 = vsel %vm279, %v275, 0
  %v287 = vsel %vm279, %v276, 0
  %v290 = vsel %vm279, %v277, 0
  %292 = vmatpush.msra.mxu0 0.0
  %293 = vmatpush.msra.mxu0 0.0
  %294 = vmatpush.msra.mxu0 0.0
  %295 = vmatpush.msra.mxu0 0.0
  %296 = vmatpush.msra.mxu0 0.0
  %297 = vmatpush.msra.mxu0 0.0
  %298 = vmatpush.msra.mxu0 0.0
  %299 = vmatpush.msra.mxu0 0.0
  %300 = vmatpush.msra.mxu0 0.0
  %301 = vmatpush.msra.mxu0 0.0
  %302 = vmatpush.msra.mxu0 0.0
  %303 = vmatpush.msra.mxu0 0.0
  %304 = vmatpush.msra.mxu0 0.0
  %305 = vmatpush.msra.mxu0 0.0
  %306 = vmatpush.msra.mxu0 0.0
  %307 = vmatpush.msra.mxu0 %v278
  %308 = vmatmul.f32.gmra.mxu0 %v281
  %v309 = vpop.f32.mrf.mxu0
  %v310 = vadd.f32 0.0, %v309
  %311 = vmatmul.f32.gmra.mxu0 %v284
  %v312 = vpop.f32.mrf.mxu0
  %v313 = vadd.f32 0.0, %v312
  %314 = vmatmul.f32.gmra.mxu0 %v287
  %v315 = vpop.f32.mrf.mxu0
  %v316 = vadd.f32 0.0, %v315
  %317 = vmatmul.f32.gmra.mxu0 %v290
  %v318 = vpop.f32.mrf.mxu0
  %v319 = vadd.f32 0.0, %v318
  %320 = vdwg.mxu0
  %s321 = scalar_lea.vmem %s2, 8
  %v322 = vld [vmem:[%s321] sm:$0xff]
  %s323 = scalar_lea.vmem %s2, 16
  %v324 = vld [vmem:[%s323] sm:$0xff]
  %325 = vmatpush.msra.mxu0 0.0
  %326 = vmatpush.msra.mxu0 0.0
  %327 = vmatpush.msra.mxu0 0.0
  %328 = vmatpush.msra.mxu0 0.0
  %329 = vmatpush.msra.mxu0 0.0
  %330 = vmatpush.msra.mxu0 0.0
  %331 = vmatpush.msra.mxu0 0.0
  %332 = vmatpush.msra.mxu0 0.0
  %333 = vmatpush.msra.mxu0 0.0
  %334 = vmatpush.msra.mxu0 0.0
  %335 = vmatpush.msra.mxu0 0.0
  %336 = vmatpush.msra.mxu0 0.0
  %337 = vmatpush.msra.mxu0 0.0
  %338 = vmatpush.msra.mxu0 0.0
  %339 = vmatpush.msra.mxu0 0.0
  %340 = vmatpush.msra.mxu0 %v324
  %341 = vmatmul.f32.gmra.mxu0 %v281
  %v342 = vpop.f32.mrf.mxu0
  %v343 = vadd.f32 0.0, %v342
  %344 = vmatmul.f32.gmra.mxu0 %v284
  %v345 = vpop.f32.mrf.mxu0
  %v346 = vadd.f32 0.0, %v345
  %347 = vmatmul.f32.gmra.mxu0 %v287
  %v348 = vpop.f32.mrf.mxu0
  %v349 = vadd.f32 0.0, %v348
  %350 = vmatmul.f32.gmra.mxu0 %v290
  %v351 = vpop.f32.mrf.mxu0
  %v352 = vadd.f32 0.0, %v351
  %353 = vdwg.mxu0
  %v354 = vrot.slane %v310, 7
  %v355 = vrot.slane %v313, 7
  %v356 = vrot.slane %v316, 7
  %v357 = vrot.slane %v319, 7
  %v358 = vsel %vm184, %v356, %v357
  %v359 = vsel %vm184, %v355, %v356
  %v360 = vsel %vm184, %v354, %v355
  %v361 = vsel %vm184, %v357, %v354
  %v362 = vrot.slane %v343, 1
  %v363 = vrot.slane %v346, 1
  %v364 = vrot.slane %v349, 1
  %v365 = vrot.slane %v352, 1
  %v366 = vsel %vm193, %v364, %v365
  %v367 = vsel %vm193, %v363, %v364
  %v368 = vsel %vm193, %v362, %v363
  %v369 = vsel %vm193, %v365, %v362
  %v370 = vsel %vm202, %v361, 0.0
  %v371 = vsel %vm203, %v360, 0.0
  %v372 = vsel %vm204, %v359, 0.0
  %v373 = vsel %vm205, %v358, 0.0
  %374 = vmatpush.msra.mxu0 0.0
  %375 = vmatpush.msra.mxu0 0.0
  %376 = vmatpush.msra.mxu0 0.0
  %377 = vmatpush.msra.mxu0 0.0
  %378 = vmatpush.msra.mxu0 0.0
  %379 = vmatpush.msra.mxu0 0.0
  %380 = vmatpush.msra.mxu0 0.0
  %381 = vmatpush.msra.mxu0 0.0
  %382 = vmatpush.msra.mxu0 0.0
  %383 = vmatpush.msra.mxu0 0.0
  %384 = vmatpush.msra.mxu0 0.0
  %385 = vmatpush.msra.mxu0 0.0
  %386 = vmatpush.msra.mxu0 0.0
  %387 = vmatpush.msra.mxu0 0.0
  %388 = vmatpush.msra.mxu0 0.0
  %389 = vmatpush.msra.mxu0 %v322
  %390 = vmatmul.f32.gmra.mxu0 %v281
  %v391 = vpop.f32.mrf.mxu0
  %v392 = vadd.f32 %v370, %v391
  %393 = vmatmul.f32.gmra.mxu0 %v284
  %v394 = vpop.f32.mrf.mxu0
  %v395 = vadd.f32 %v371, %v394
  %396 = vmatmul.f32.gmra.mxu0 %v287
  %v397 = vpop.f32.mrf.mxu0
  %v398 = vadd.f32 %v372, %v397
  %399 = vmatmul.f32.gmra.mxu0 %v290
  %v400 = vpop.f32.mrf.mxu0
  %v401 = vadd.f32 %v373, %v400
  %402 = vdwg.mxu0
  %v403 = vsel %vm246, %v368, 0.0
  %v404 = vsel %vm247, %v367, 0.0
  %v405 = vsel %vm248, %v366, 0.0
  %v406 = vsel %vm249, %v369, 0.0
  %v407 = vadd.f32 %v392, %v403
  %v408 = vadd.f32 %v395, %v404
  %v409 = vadd.f32 %v398, %v405
  %v410 = vadd.f32 %v401, %v406
  %v411 = vld [vmem:[%s5] sm:$0x1]
  %v413 = vperm.slane %v411, 0
  %v415 = vmul.f32 %v407, %v413
  %v416 = vmul.f32 %v408, %v413
  %v417 = vmul.f32 %v409, %v413
  %v418 = vmul.f32 %v410, %v413
  %v419 = vld [vmem:[%s6] sm:$0x1]
  %v421 = vperm.slane %v419, 0
  %v423 = vadd.f32 %v415, %v421
  %v424 = vadd.f32 %v416, %v421
  %v425 = vadd.f32 %v417, %v421
  %v426 = vadd.f32 %v418, %v421
  %v427 = vld [vmem:[%s7] sm:$0xf]
  %v428 = vld [vmem:[%s8] sm:$0x1]
  %v430 = vperm.slane %v428, 0
  %v433 = vsel %vm111, %v427, 0
  %435 = vmatpush.msra.mxu0 0.0
  %436 = vmatpush.msra.mxu0 0.0
  %437 = vmatpush.msra.mxu0 0.0
  %438 = vmatpush.msra.mxu0 0.0
  %439 = vmatpush.msra.mxu0 0.0
  %440 = vmatpush.msra.mxu0 0.0
  %441 = vmatpush.msra.mxu0 0.0
  %442 = vmatpush.msra.mxu0 0.0
  %443 = vmatpush.msra.mxu0 0.0
  %444 = vmatpush.msra.mxu0 0.0
  %445 = vmatpush.msra.mxu0 0.0
  %446 = vmatpush.msra.mxu0 0.0
  %447 = vmatpush.msra.mxu0 0.0
  %448 = vmatpush.msra.mxu0 0.0
  %449 = vmatpush.msra.mxu0 0.0
  %450 = vmatpush.msra.mxu0 %v433
  %451 = vmatmul.f32.gmra.mxu0 %v100
  %v452 = vpop.f32.mrf.mxu0
  %v453 = vadd.f32 %v430, %v452
  %454 = vmatmul.f32.gmra.mxu0 %v103
  %v455 = vpop.f32.mrf.mxu0
  %v456 = vadd.f32 %v430, %v455
  %457 = vmatmul.f32.gmra.mxu0 %v106
  %v458 = vpop.f32.mrf.mxu0
  %v459 = vadd.f32 %v430, %v458
  %460 = vmatmul.f32.gmra.mxu0 %v109
  %v461 = vpop.f32.mrf.mxu0
  %v462 = vadd.f32 %v430, %v461
  %463 = vdwg.mxu0
  %v464 = vadd.f32 %v423, %v453
  %v465 = vadd.f32 %v424, %v456
  %v466 = vadd.f32 %v425, %v459
  %v467 = vadd.f32 %v426, %v462
  %v468 = vmax.f32 %v464, 0.0
  %v469 = vmax.f32 %v465, 0.0
  %v470 = vmax.f32 %v466, 0.0
  %v471 = vmax.f32 %v467, 0.0
  %472 = vst.msk [vmem:[%s9] sm:$0xff] %vm279, %v468
  %473 = vst.msk [vmem:[%s9 + $0x8] sm:$0xff] %vm279, %v469
  %474 = vst.msk [vmem:[%s9 + $0x10] sm:$0xff] %vm279, %v470
  %475 = vst.msk [vmem:[%s9 + $0x18] sm:$0xff] %vm279, %v471
  // Predicated region
  $region38: #{tpu_custom_call.1} parent=0 // pred_check
    _
  $region39: #{tpu_custom_call.1} parent=0 // pred_check_branch
    %477 = sbr.rel (0) target = $region41
  $region40: #{tpu_custom_call.1} parent=0 // pred_region
    _
  $region41: #{tpu_custom_call.1} parent=0 // pred_fallthru
    _
  // Predicated region
  $region42: #{tpu_custom_call.1} parent=0 // pred_check
    _
  $region43: #{tpu_custom_call.1} parent=0 // pred_check_branch
    %479 = sbr.rel (0) target = $region45
  $region44: #{tpu_custom_call.1} parent=0 // pred_region
    _
  $region45: #{tpu_custom_call.1} parent=0 // pred_fallthru
    _

</llo_original>
